<compile_context>
chip_gen: v6e
topology: v6e:2x2x1
jax: 0.10.0
libtpu: 0.0.40
codegen_flags: <defaults>
</compile_context>

<pallas_src>
import functools

import jax
import jax.numpy as jnp
from jax import lax
from jax.experimental import pallas as pl
from jax.experimental.pallas import tpu as pltpu

MASK = -1.0          # fill value from the PyTorch module (MASK = -1)
NEG_INF = -1e30      # regions >= max_r are sliced away in torch -> exclude from the max


def _round_up(x, m):
    return (x + m - 1) // m * m


def _vha_kernel(imgs_ref, caps_ref, rfill_ref, wkeep_ref, out_ref, *, n_reg, ti):
    # imgs_ref : (n_reg*ti, d)   bf16, region-major within the image block (row = r*ti + t)
    # caps_ref : (d, tbcw)       bf16, caption-word slab tile (N lane-dense)
    # rfill_ref: (n_reg, ti)     f32: 0 valid / MASK padded-but-<max_r / NEG_INF >=max_r
    # wkeep_ref: (1, tbcw)       f32: 1 valid word / 0 padded word
    # out_ref  : (ti, tbcw)      f32
    tbcw = caps_ref.shape[1]

    # Single lane-dense MXU matmul per grid step (bf16 in, f32 accumulate).
    sims = jnp.dot(imgs_ref[...], caps_ref[...],
                   preferred_element_type=jnp.float32)        # (n_reg*ti, tbcw)
    sims = sims.reshape(n_reg, ti, tbcw)

    # Region masking is add-only (padded-region features were zeroed in the wrapper).
    masked = sims + rfill_ref[...][:, :, None]

    # Hard assignment coding: max over regions = leading-axis VPU vmax,
    # result already in the (ti, tbcw) layout of out_ref.
    maxed = jnp.max(masked, axis=0)                           # (ti, tbcw)

    # Word masking: invalid words -> MASK.
    out_ref[...] = jnp.where(wkeep_ref[...] > 0.5, maxed, MASK)


def vha_coding(imgs, caps, img_lens, cap_lens, *, tile_i=None, tile_bcw=None):
    """JAX/Pallas equivalent of VHACoding.forward.

    imgs: (n_img, n_reg, d), caps: (n_cap, n_wrd, d)
    img_lens: (n_img,) int, cap_lens: (n_cap,) int
    Returns float32 (n_img, n_cap, max_w).
    Note: the contraction runs on the MXU with bf16 inputs / f32 accumulation.
    """
    imgs = jnp.asarray(imgs, jnp.float32)
    caps = jnp.asarray(caps, jnp.float32)
    img_lens = jnp.asarray(img_lens, jnp.int32)
    cap_lens = jnp.asarray(cap_lens, jnp.int32)

    n_img, n_reg, d = imgs.shape
    n_cap, n_wrd, d2 = caps.shape
    assert d == d2
    bcw = n_cap * n_wrd

    # Only the static output crop needs a concrete value (mirrors torch int(cap_lens.max())).
    max_w = int(jax.device_get(jnp.max(cap_lens)))
    # max_r stays traced -> no extra device->host round trip.
    max_r = jnp.max(img_lens)

    # ---- tile sizes --------------------------------------------------------
    if tile_i is None:
        tile_i = min(32, _round_up(n_img, 8))           # >=256 M rows/step when n_img allows
    if tile_bcw is None:
        tile_bcw = min(1024, _round_up(bcw, 128))       # lane-aligned caption tile
    n_img_pad = _round_up(n_img, tile_i)
    n_reg_pad = _round_up(n_reg, 8)
    bcw_pad = _round_up(bcw, tile_bcw)
    n_blocks = n_img_pad // tile_i
    n_cw_tiles = bcw_pad // tile_bcw

    # ---- wrapper-side layout plumbing (all tiny / one-time XLA ops) --------
    imgs_p = jnp.zeros((n_img_pad, n_reg_pad, d), jnp.float32).at[:n_img, :n_reg].set(imgs)
    lens_p = jnp.zeros((n_img_pad,), jnp.int32).at[:n_img].set(img_lens)

    r_idx = jnp.arange(n_reg_pad, dtype=jnp.int32)[None, :]
    valid_r = r_idx < lens_p[:, None]                                  # (n_img_pad, n_reg_pad)
    # Zero padded-region features so the kernel needs only an additive fill (no rkeep multiply).
    imgs_p = imgs_p * valid_r[:, :, None].astype(jnp.float32)
    rfill = jnp.where(valid_r, 0.0,
                      jnp.where(r_idx < max_r, MASK, NEG_INF)).astype(jnp.float32)

    # Region-major M layout within each image block: rows ordered (block, region, image).
    imgs2d = (imgs_p.astype(jnp.bfloat16)
              .reshape(n_blocks, tile_i, n_reg_pad, d)
              .transpose(0, 2, 1, 3)
              .reshape(n_blocks * n_reg_pad * tile_i, d))
    rfill2d = (rfill.reshape(n_blocks, tile_i, n_reg_pad)
               .transpose(0, 2, 1)
               .reshape(n_blocks * n_reg_pad, tile_i))

    # Caption slab: (d, bcw_pad) bf16, standard A @ B layout, padded to 128-aligned lanes.
    caps2d = jnp.zeros((bcw_pad, d), jnp.float32).at[:bcw].set(caps.reshape(bcw, d))
    caps2d = caps2d.T.astype(jnp.bfloat16)                             # (d, bcw_pad)

    w_idx = jnp.arange(n_wrd, dtype=jnp.int32)[None, :]
    wkeep_row = (w_idx < cap_lens[:, None]).astype(jnp.float32).reshape(bcw)
    wkeep = jnp.zeros((1, bcw_pad), jnp.float32).at[0, :bcw].set(wkeep_row)

    kernel = functools.partial(_vha_kernel, n_reg=n_reg_pad, ti=tile_i)
    out_flat = pl.pallas_call(
        kernel,
        grid=(n_blocks, n_cw_tiles),                     # caption axis innermost
        in_specs=[
            pl.BlockSpec((n_reg_pad * tile_i, d), lambda i, j: (i, 0)),   # image regions
            pl.BlockSpec((d, tile_bcw), lambda i, j: (0, j)),             # caption tile
            pl.BlockSpec((n_reg_pad, tile_i), lambda i, j: (i, 0)),       # region fill
            pl.BlockSpec((1, tile_bcw), lambda i, j: (0, j)),             # word keep
        ],
        out_specs=pl.BlockSpec((tile_i, tile_bcw), lambda i, j: (i, j)),
        out_shape=jax.ShapeDtypeStruct((n_img_pad, bcw_pad), jnp.float32),
        compiler_params=pltpu.CompilerParams(
            dimension_semantics=("parallel", "arbitrary")),
    )(imgs2d, caps2d, rfill2d, wkeep)

    sims = out_flat[:n_img, :bcw].reshape(n_img, n_cap, n_wrd)[:, :, :max_w]
    return sims


def _reference(imgs, caps, img_lens, cap_lens):
    """Pure-JAX port of the PyTorch VHACoding.forward for validation."""
    max_r = int(img_lens.max())
    max_w = int(cap_lens.max())
    sims = jnp.einsum('ird,cwd->icrw', imgs, caps,
                      precision=lax.Precision.HIGHEST)               # raw fg sims
    sims = sims[:, :, :max_r, :max_w]
    img_mask = jnp.arange(max_r)[None, :] < img_lens[:, None]        # (n_img, max_r)
    cap_mask = jnp.arange(max_w)[None, :] < cap_lens[:, None]        # (n_cap, max_w)
    mask = img_mask[:, None, :, None] & cap_mask[None, :, None, :]
    sims = jnp.where(mask, sims, MASK)
    return jnp.max(sims, axis=-2)                                    # (n_img, n_cap, max_w)


if __name__ == "__main__":
    import numpy as np

    key = jax.random.PRNGKey(0)
    n_img, n_cap = 4, 16
    n_reg, n_wrd, d = 16, 8, 32

    k1, k2 = jax.random.split(key)
    imgs = jax.random.normal(k1, (n_img, n_reg, d), dtype=jnp.float32)
    caps = jax.random.normal(k2, (n_cap, n_wrd, d), dtype=jnp.float32)
    # Round features to bf16-representable values so the bf16 MXU path is exact and the
    # comparison only sees accumulation-order noise.
    imgs = imgs.astype(jnp.bfloat16).astype(jnp.float32)
    caps = caps.astype(jnp.bfloat16).astype(jnp.float32)

    img_lens = jnp.array([16, 11, 7, 13], dtype=jnp.int32)
    cap_lens = jnp.array([8, 6, 7, 5, 8, 4, 3, 6, 8, 7, 5, 6, 4, 8, 7, 6],
                         dtype=jnp.int32)

    out = vha_coding(imgs, caps, img_lens, cap_lens)
    out = jax.block_until_ready(out)

    ref = _reference(imgs, caps, img_lens, cap_lens)
    assert out.shape == ref.shape, (out.shape, ref.shape)
    np.testing.assert_allclose(np.asarray(out), np.asarray(ref), rtol=1e-3, atol=1e-3)
    print("KERNEL_OK")
</pallas_src>

<mosaic_0001>
module attributes {stable_mosaic.version = 11 : i64} {
  func.func @_vha_kernel(%arg0: i32, %arg1: i32, %arg2: memref<128x32xbf16, #tpu.memory_space<vmem>>, %arg3: memref<32x128xbf16, #tpu.memory_space<vmem>>, %arg4: memref<16x8xf32, #tpu.memory_space<vmem>>, %arg5: memref<1x128xf32, #tpu.memory_space<vmem>>, %arg6: memref<8x128xf32, #tpu.memory_space<vmem>>) attributes {dimension_semantics = [#tpu.dimension_semantics<parallel>, #tpu.dimension_semantics<arbitrary>], iteration_bounds = array<i64: 1, 1>, scalar_prefetch = 0 : i64, scratch_operands = 0 : i64, tpu.core_type = #tpu.core_type<tc>, window_params = [{transform_indices = @transform_0, window_bounds = array<i64: 128, 32>}, {transform_indices = @transform_1, window_bounds = array<i64: 32, 128>}, {transform_indices = @transform_2, window_bounds = array<i64: 16, 8>}, {transform_indices = @transform_3, window_bounds = array<i64: 1, 128>}, {transform_indices = @transform_4, window_bounds = array<i64: 8, 128>}]} {
    %c0 = arith.constant 0 : index
    %c0_0 = arith.constant 0 : index
    %0 = vector.load %arg2[%c0, %c0_0] : memref<128x32xbf16, #tpu.memory_space<vmem>>, vector<128x32xbf16>
    %c0_1 = arith.constant 0 : index
    %c0_2 = arith.constant 0 : index
    %1 = vector.load %arg3[%c0_1, %c0_2] : memref<32x128xbf16, #tpu.memory_space<vmem>>, vector<32x128xbf16>
    %cst = arith.constant dense<0.000000e+00> : vector<128x128xf32>
    %2 = tpu.matmul %0, %1, %cst {dimension_numbers = #tpu.dot_dimension_numbers<[1], [0], [0], [1], [0, 0, 1, 1], [], []>} : vector<128x32xbf16>, vector<32x128xbf16>, vector<128x128xf32> -> vector<128x128xf32>
    %3 = vector.shape_cast %2 : vector<128x128xf32> to vector<16x8x128xf32>
    %c0_3 = arith.constant 0 : index
    %c0_4 = arith.constant 0 : index
    %4 = vector.load %arg4[%c0_3, %c0_4] : memref<16x8xf32, #tpu.memory_space<vmem>>, vector<16x8xf32>
    %5 = vector.shape_cast %4 : vector<16x8xf32> to vector<16x8x1xf32>
    %6 = vector.broadcast %5 : vector<16x8x1xf32> to vector<16x8x128xf32>
    %7 = arith.addf %3, %6 : vector<16x8x128xf32>
    %cst_5 = arith.constant dense<0xFF800000> : vector<8x128xf32>
    %8 = vector.multi_reduction <maximumf>, %7, %cst_5 [0] : vector<16x8x128xf32> to vector<8x128xf32>
    %c0_6 = arith.constant 0 : index
    %c0_7 = arith.constant 0 : index
    %9 = vector.load %arg5[%c0_6, %c0_7] : memref<1x128xf32, #tpu.memory_space<vmem>>, vector<1x128xf32>
    %cst_8 = arith.constant 5.000000e-01 : f32
    %10 = vector.broadcast %cst_8 : f32 to vector<1x128xf32>
    %11 = arith.cmpf ogt, %9, %10 : vector<1x128xf32>
    %cst_9 = arith.constant -1.000000e+00 : f32
    %12 = vector.shape_cast %11 : vector<1x128xi1> to vector<1x128xi1>
    %13 = vector.broadcast %12 : vector<1x128xi1> to vector<8x128xi1>
    %14 = vector.broadcast %cst_9 : f32 to vector<8x128xf32>
    %15 = arith.select %13, %8, %14 : vector<8x128xi1>, vector<8x128xf32>
    %c0_10 = arith.constant 0 : index
    %c0_11 = arith.constant 0 : index
    %16 = vector.load %arg6[%c0_10, %c0_11] : memref<8x128xf32, #tpu.memory_space<vmem>>, vector<8x128xf32>
    tpu.vector_store %arg6[%c0_10, %c0_11], %15 {strides = array<i32>} : memref<8x128xf32, #tpu.memory_space<vmem>>, vector<8x128xf32>,
    return
  }
  func.func @transform_0(%arg0: i32, %arg1: i32) -> (i32, i32) {
    %c0_i32 = arith.constant 0 : i32
    %c0_i32_0 = arith.constant 0 : i32
    return %arg0, %c0_i32 : i32, i32
  }
  func.func @transform_1(%arg0: i32, %arg1: i32) -> (i32, i32) {
    %c0_i32 = arith.constant 0 : i32
    %c0_i32_0 = arith.constant 0 : i32
    return %c0_i32, %arg1 : i32, i32
  }
  func.func @transform_2(%arg0: i32, %arg1: i32) -> (i32, i32) {
    %c0_i32 = arith.constant 0 : i32
    %c0_i32_0 = arith.constant 0 : i32
    return %arg0, %c0_i32 : i32, i32
  }
  func.func @transform_3(%arg0: i32, %arg1: i32) -> (i32, i32) {
    %c0_i32 = arith.constant 0 : i32
    %c0_i32_0 = arith.constant 0 : i32
    return %c0_i32, %arg1 : i32, i32
  }
  func.func @transform_4(%arg0: i32, %arg1: i32) -> (i32, i32) {
    %c0_i32 = arith.constant 0 : i32
    return %arg0, %arg1 : i32, i32
  }
}

</mosaic_0001>

<llo_original>
// kernel: tpu_custom_call.1
$region0: #{tpu_custom_call.1}
  #allocation0 [shape = 'u32[]', space=smem, size = 0x4, offset = 0x4, fixed_abs, tag = 'smem constant byte address 0x4 - core index']
  #allocation1 [shape = 'u32[144,128]{1,0:T(1,128)}', space=vmem, size = 0x12000, scoped, tag = 'internal scratch']
  %s0 = inlined_call_operand.vmem [shape: bf16[128,32], index: 0, kind: input, shape index: {}]
  %s1 = inlined_call_operand.vmem [shape: bf16[32,128], index: 1, kind: input, shape index: {}]
  %s2 = inlined_call_operand.vmem [shape: f32[16,8], index: 2, kind: input, shape index: {}]
  %s3 = inlined_call_operand.vmem [shape: f32[1,128], index: 3, kind: input, shape index: {}]
  %s4 = inlined_call_operand.hbm [shape: f32[8,128], index: 4, kind: output, shape index: {}]
  %s5 = sld [smem:[#allocation0]]
  $region26: #{tpu_custom_call.1} parent=0
    _
  %s7 = ssub.s32 1, %s5
  %s8 = scalar_select 0, %s7, %s5
  $region1: #{tpu_custom_call.1} parent=0
    #allocation2 [shape = 'u8[4096]{0}', space=vmem, size = 0x1000, scoped, tag = 'output window, operand 0, single buffered']
    #allocation3 [shape = 's32[1]{0}', space=sflag, size = 0x4, scoped, tag = 'scoped memory for tpu_custom_call.1']
    %9 = vsyncpa [#allocation3], 0
    // Predicated region
    $region2: #{tpu_custom_call.1} parent=1 // pred_check
      _
    $region3: #{tpu_custom_call.1} parent=1 // pred_check_branch
      %11 = sbr.rel (0) target = $region5
    $region4: #{tpu_custom_call.1} parent=1 // pred_region
      _
    $region5: #{tpu_custom_call.1} parent=1 // pred_fallthru
      _
    // Predicated region
    $region6: #{tpu_custom_call.1} parent=1 // pred_check
      _
    $region7: #{tpu_custom_call.1} parent=1 // pred_check_branch
      %13 = sbr.rel (0) target = $region9
    $region8: #{tpu_custom_call.1} parent=1 // pred_region
      _
    $region9: #{tpu_custom_call.1} parent=1 // pred_fallthru
      _
    // Predicated region
    $region10: #{tpu_custom_call.1} parent=1 // pred_check
      _
    $region11: #{tpu_custom_call.1} parent=1 // pred_check_branch
      %15 = sbr.rel (0) target = $region13
    $region12: #{tpu_custom_call.1} parent=1 // pred_region
      _
    $region13: #{tpu_custom_call.1} parent=1 // pred_fallthru
      _
    // Predicated region
    $region14: #{tpu_custom_call.1} parent=1 // pred_check
      _
    $region15: #{tpu_custom_call.1} parent=1 // pred_check_branch
      %17 = sbr.rel (0) target = $region17
    $region16: #{tpu_custom_call.1} parent=1 // pred_region
      _
    $region17: #{tpu_custom_call.1} parent=1 // pred_fallthru
      _
    %v19 = vld [vmem:[%s0] sm:$0xf]
    %v20 = vld [vmem:[%s0 + $0x4] sm:$0xf]
    %v21 = vld [vmem:[%s0 + $0x8] sm:$0xf]
    %v22 = vld [vmem:[%s0 + $0xc] sm:$0xf]
    %v23 = vld [vmem:[%s0 + $0x10] sm:$0xf]
    %v24 = vld [vmem:[%s0 + $0x14] sm:$0xf]
    %v25 = vld [vmem:[%s0 + $0x18] sm:$0xf]
    %v26 = vld [vmem:[%s0 + $0x1c] sm:$0xf]
    %v27 = vld [vmem:[%s0 + $0x20] sm:$0xf]
    %v28 = vld [vmem:[%s0 + $0x24] sm:$0xf]
    %v29 = vld [vmem:[%s0 + $0x28] sm:$0xf]
    %v30 = vld [vmem:[%s0 + $0x2c] sm:$0xf]
    %v31 = vld [vmem:[%s0 + $0x30] sm:$0xf]
    %v32 = vld [vmem:[%s0 + $0x34] sm:$0xf]
    %v33 = vld [vmem:[%s0 + $0x38] sm:$0xf]
    %v34 = vld [vmem:[%s0 + $0x3c] sm:$0xf]
    %v35 = vld [vmem:[%s1] sm:$0xf]
    %v36 = vld [vmem:[%s1 + $0x4] sm:$0xf]
    %v37 = vld [vmem:[%s1 + $0x8] sm:$0xf]
    %v38 = vld [vmem:[%s1 + $0xc] sm:$0xf]
    %v55 = vunpack.c.l.b16 %v19
    %v56 = vunpack.c.l.b16 %v20
    %v57 = vunpack.c.l.b16 %v21
    %v58 = vunpack.c.l.b16 %v22
    %v59 = vunpack.c.l.b16 %v23
    %v60 = vunpack.c.l.b16 %v24
    %v61 = vunpack.c.l.b16 %v25
    %v62 = vunpack.c.l.b16 %v26
    %v63 = vunpack.c.l.b16 %v27
    %v64 = vunpack.c.l.b16 %v28
    %v65 = vunpack.c.l.b16 %v29
    %v66 = vunpack.c.l.b16 %v30
    %v67 = vunpack.c.l.b16 %v31
    %v68 = vunpack.c.l.b16 %v32
    %v69 = vunpack.c.l.b16 %v33
    %v70 = vunpack.c.l.b16 %v34
    %v71 = vpack.c.b16 %v56, %v55
    %v72 = vpack.c.b16 %v58, %v57
    %v73 = vpack.c.b16 %v60, %v59
    %v74 = vpack.c.b16 %v62, %v61
    %v75 = vpack.c.b16 %v64, %v63
    %v76 = vpack.c.b16 %v66, %v65
    %v77 = vpack.c.b16 %v68, %v67
    %v78 = vpack.c.b16 %v70, %v69
    %v83 = vunpack.c.l.b16 %v35
    %v84 = vunpack.c.l.b16 %v36
    %v85 = vunpack.c.l.b16 %v37
    %v86 = vunpack.c.l.b16 %v38
    %v87 = vpack.c.b16 %v84, %v83
    %v88 = vpack.c.b16 %v86, %v85
    %vm91 = vcmask 261120
    %v93 = vsel %vm91, %v71, 0
    %v96 = vsel %vm91, %v72, 0
    %v99 = vsel %vm91, %v73, 0
    %v102 = vsel %vm91, %v74, 0
    %v105 = vsel %vm91, %v75, 0
    %v108 = vsel %vm91, %v76, 0
    %v111 = vsel %vm91, %v77, 0
    %v114 = vsel %vm91, %v78, 0
    %116 = vmatprep.subr.bf16.mxu0 0
    %117 = vmatpush1.bf16.msra.mxu0 0
    %118 = vmatprep.subr.bf16.mxu0 0
    %119 = vmatpush1.bf16.msra.mxu0 0
    %120 = vmatprep.subr.bf16.mxu0 0
    %121 = vmatpush1.bf16.msra.mxu0 0
    %122 = vmatprep.subr.bf16.mxu0 0
    %123 = vmatpush1.bf16.msra.mxu0 0
    %124 = vmatprep.subr.bf16.mxu0 0
    %125 = vmatpush1.bf16.msra.mxu0 0
    %126 = vmatprep.subr.bf16.mxu0 0
    %127 = vmatpush1.bf16.msra.mxu0 0
    %128 = vmatprep.subr.bf16.mxu0 0
    %129 = vmatpush1.bf16.msra.mxu0 %v88
    %130 = vmatprep.subr.bf16.mxu0 0
    %131 = vmatpush1.bf16.msra.mxu0 %v87
    %132 = vmatprep.subr.bf16.mxu0 0
    %133 = vmatpush2.bf16.msra.mxu0 0
    %134 = vmatprep.subr.bf16.mxu0 0
    %135 = vmatpush2.bf16.msra.mxu0 0
    %136 = vmatprep.subr.bf16.mxu0 0
    %137 = vmatpush2.bf16.msra.mxu0 0
    %138 = vmatprep.subr.bf16.mxu0 0
    %139 = vmatpush2.bf16.msra.mxu0 0
    %140 = vmatprep.subr.bf16.mxu0 0
    %141 = vmatpush2.bf16.msra.mxu0 0
    %142 = vmatprep.subr.bf16.mxu0 0
    %143 = vmatpush2.bf16.msra.mxu0 0
    %144 = vmatprep.subr.bf16.mxu0 0
    %145 = vmatpush2.bf16.msra.mxu0 0
    %146 = vmatprep.subr.bf16.mxu0 0
    %147 = vmatpush2.bf16.msra.mxu0 0
    %148 = vmatprep.mubr.bf16.mxu0 0
    %149 = vmatmul.mubr.bf16.gmra.mxu0 %v93
    %v150 = vpop.f32.mrf.mxu0
    %v151 = vadd.f32 0.0, %v150
    %v152 = vpop.f32.mrf.mxu0
    %v153 = vpop.f32.mrf.mxu0
    %v154 = vadd.f32 0.0, %v153
    %v155 = vpop.f32.mrf.mxu0
    %156 = vmatprep.mubr.bf16.mxu0 0
    %157 = vmatmul.mubr.bf16.gmra.mxu0 %v96
    %v158 = vpop.f32.mrf.mxu0
    %v159 = vadd.f32 0.0, %v158
    %v160 = vpop.f32.mrf.mxu0
    %v161 = vpop.f32.mrf.mxu0
    %v162 = vadd.f32 0.0, %v161
    %v163 = vpop.f32.mrf.mxu0
    %164 = vmatprep.mubr.bf16.mxu0 0
    %165 = vmatmul.mubr.bf16.gmra.mxu0 %v99
    %v166 = vpop.f32.mrf.mxu0
    %v167 = vadd.f32 0.0, %v166
    %v168 = vpop.f32.mrf.mxu0
    %v169 = vpop.f32.mrf.mxu0
    %v170 = vadd.f32 0.0, %v169
    %v171 = vpop.f32.mrf.mxu0
    %172 = vmatprep.mubr.bf16.mxu0 0
    %173 = vmatmul.mubr.bf16.gmra.mxu0 %v102
    %v174 = vpop.f32.mrf.mxu0
    %v175 = vadd.f32 0.0, %v174
    %v176 = vpop.f32.mrf.mxu0
    %v177 = vpop.f32.mrf.mxu0
    %v178 = vadd.f32 0.0, %v177
    %v179 = vpop.f32.mrf.mxu0
    %180 = vmatprep.mubr.bf16.mxu0 0
    %181 = vmatmul.mubr.bf16.gmra.mxu0 %v105
    %v182 = vpop.f32.mrf.mxu0
    %v183 = vadd.f32 0.0, %v182
    %v184 = vpop.f32.mrf.mxu0
    %v185 = vpop.f32.mrf.mxu0
    %v186 = vadd.f32 0.0, %v185
    %v187 = vpop.f32.mrf.mxu0
    %188 = vmatprep.mubr.bf16.mxu0 0
    %189 = vmatmul.mubr.bf16.gmra.mxu0 %v108
    %v190 = vpop.f32.mrf.mxu0
    %v191 = vadd.f32 0.0, %v190
    %v192 = vpop.f32.mrf.mxu0
    %v193 = vpop.f32.mrf.mxu0
    %v194 = vadd.f32 0.0, %v193
    %v195 = vpop.f32.mrf.mxu0
    %196 = vmatprep.mubr.bf16.mxu0 0
    %197 = vmatmul.mubr.bf16.gmra.mxu0 %v111
    %v198 = vpop.f32.mrf.mxu0
    %v199 = vadd.f32 0.0, %v198
    %v200 = vpop.f32.mrf.mxu0
    %v201 = vpop.f32.mrf.mxu0
    %v202 = vadd.f32 0.0, %v201
    %v203 = vpop.f32.mrf.mxu0
    %204 = vmatprep.mubr.bf16.mxu0 0
    %205 = vmatmul.mubr.bf16.gmra.mxu0 %v114
    %v206 = vpop.f32.mrf.mxu0
    %v207 = vadd.f32 0.0, %v206
    %v208 = vpop.f32.mrf.mxu0
    %v209 = vpop.f32.mrf.mxu0
    %v210 = vadd.f32 0.0, %v209
    %v211 = vpop.f32.mrf.mxu0
    %212 = vdwg.mxu0
    %v213 = vld [vmem:[%s2] sm:$0xff]
    %v214 = vld [vmem:[%s2 + $0x8] sm:$0xff]
    %v215 = vlaneseq
    %v216 = vshrl.u32 %v215, 7
    %v217 = vsub.s32 0, %v216
    %v218 = vrot.slane %v213, %v217
    %220 = vbcast.lane.b32.xlu0 %v218, 256
    %v221 = vpop.permute.xlu0 %220
    %v222 = vlaneseq
    %v223 = vshrl.u32 %v222, 7
    %v224 = vsub.s32 1, %v223
    %v225 = vrot.slane %v213, %v224
    %227 = vbcast.lane.b32.xlu0 %v225, 256
    %v228 = vpop.permute.xlu0 %227
    %v229 = vlaneseq
    %v230 = vshrl.u32 %v229, 7
    %v231 = vsub.s32 2, %v230
    %v232 = vrot.slane %v213, %v231
    %234 = vbcast.lane.b32.xlu0 %v232, 256
    %v235 = vpop.permute.xlu0 %234
    %v236 = vlaneseq
    %v237 = vshrl.u32 %v236, 7
    %v238 = vsub.s32 3, %v237
    %v239 = vrot.slane %v213, %v238
    %241 = vbcast.lane.b32.xlu0 %v239, 256
    %v242 = vpop.permute.xlu0 %241
    %v243 = vlaneseq
    %v244 = vshrl.u32 %v243, 7
    %v245 = vsub.s32 4, %v244
    %v246 = vrot.slane %v213, %v245
    %248 = vbcast.lane.b32.xlu0 %v246, 256
    %v249 = vpop.permute.xlu0 %248
    %v250 = vlaneseq
    %v251 = vshrl.u32 %v250, 7
    %v252 = vsub.s32 5, %v251
    %v253 = vrot.slane %v213, %v252
    %255 = vbcast.lane.b32.xlu0 %v253, 256
    %v256 = vpop.permute.xlu0 %255
    %v257 = vlaneseq
    %v258 = vshrl.u32 %v257, 7
    %v259 = vsub.s32 6, %v258
    %v260 = vrot.slane %v213, %v259
    %262 = vbcast.lane.b32.xlu0 %v260, 256
    %v263 = vpop.permute.xlu0 %262
    %v264 = vlaneseq
    %v265 = vshrl.u32 %v264, 7
    %v266 = vsub.s32 7, %v265
    %v267 = vrot.slane %v213, %v266
    %269 = vbcast.lane.b32.xlu0 %v267, 256
    %v270 = vpop.permute.xlu0 %269
    %v271 = vlaneseq
    %v272 = vshrl.u32 %v271, 7
    %v273 = vsub.s32 0, %v272
    %v274 = vrot.slane %v214, %v273
    %276 = vbcast.lane.b32.xlu0 %v274, 256
    %v277 = vpop.permute.xlu0 %276
    %v278 = vlaneseq
    %v279 = vshrl.u32 %v278, 7
    %v280 = vsub.s32 1, %v279
    %v281 = vrot.slane %v214, %v280
    %283 = vbcast.lane.b32.xlu0 %v281, 256
    %v284 = vpop.permute.xlu0 %283
    %v285 = vlaneseq
    %v286 = vshrl.u32 %v285, 7
    %v287 = vsub.s32 2, %v286
    %v288 = vrot.slane %v214, %v287
    %290 = vbcast.lane.b32.xlu0 %v288, 256
    %v291 = vpop.permute.xlu0 %290
    %v292 = vlaneseq
    %v293 = vshrl.u32 %v292, 7
    %v294 = vsub.s32 3, %v293
    %v295 = vrot.slane %v214, %v294
    %297 = vbcast.lane.b32.xlu0 %v295, 256
    %v298 = vpop.permute.xlu0 %297
    %v299 = vlaneseq
    %v300 = vshrl.u32 %v299, 7
    %v301 = vsub.s32 4, %v300
    %v302 = vrot.slane %v214, %v301
    %304 = vbcast.lane.b32.xlu0 %v302, 256
    %v305 = vpop.permute.xlu0 %304
    %v306 = vlaneseq
    %v307 = vshrl.u32 %v306, 7
    %v308 = vsub.s32 5, %v307
    %v309 = vrot.slane %v214, %v308
    %311 = vbcast.lane.b32.xlu0 %v309, 256
    %v312 = vpop.permute.xlu0 %311
    %v313 = vlaneseq
    %v314 = vshrl.u32 %v313, 7
    %v315 = vsub.s32 6, %v314
    %v316 = vrot.slane %v214, %v315
    %318 = vbcast.lane.b32.xlu0 %v316, 256
    %v319 = vpop.permute.xlu0 %318
    %v320 = vlaneseq
    %v321 = vshrl.u32 %v320, 7
    %v322 = vsub.s32 7, %v321
    %v323 = vrot.slane %v214, %v322
    %325 = vbcast.lane.b32.xlu0 %v323, 256
    %v326 = vpop.permute.xlu0 %325
    %v327 = vadd.f32 %v151, %v221
    %v328 = vadd.f32 %v154, %v228
    %v329 = vadd.f32 %v159, %v235
    %v330 = vadd.f32 %v162, %v242
    %v331 = vadd.f32 %v167, %v249
    %v332 = vadd.f32 %v170, %v256
    %v333 = vadd.f32 %v175, %v263
    %v334 = vadd.f32 %v178, %v270
    %v335 = vadd.f32 %v183, %v277
    %v336 = vadd.f32 %v186, %v284
    %v337 = vadd.f32 %v191, %v291
    %v338 = vadd.f32 %v194, %v298
    %v339 = vadd.f32 %v199, %v305
    %v340 = vadd.f32 %v202, %v312
    %v341 = vadd.f32 %v207, %v319
    %v342 = vadd.f32 %v210, %v326
    %v343 = vmax.f32 %v327, %v331
    %v344 = vmax.f32 %v328, %v332
    %v345 = vmax.f32 %v329, %v333
    %v346 = vmax.f32 %v330, %v334
    %v347 = vmax.f32 %v343, %v335
    %v348 = vmax.f32 %v344, %v336
    %v349 = vmax.f32 %v345, %v337
    %v350 = vmax.f32 %v346, %v338
    %v351 = vmax.f32 %v347, %v339
    %v352 = vmax.f32 %v348, %v340
    %v353 = vmax.f32 %v349, %v341
    %v354 = vmax.f32 %v350, %v342
    %v355 = vmax.f32 %v351, %v352
    %v356 = vmax.f32 %v353, %v354
    %v357 = vmax.f32 %v355, %v356
    %v358 = vld [vmem:[%s3] sm:$0x1]
    %vm359 = vcmp.gt.f32.partialorder %v358, 0.5
    %v360 = vsel %vm359, 1, 0
    %v361 = vlaneseq
    %v362 = vshrl.u32 %v361, 7
    %v363 = vsub.s32 0, %v362
    %v364 = vrot.slane %v360, %v363
    %vm365 = vcmp.eq.s32.totalorder %v364, 1
    %v366 = vsel %vm365, %v357, -1.0
    %367 = vst [vmem:[#allocation2] sm:$0xff] %v366
    // Predicated region
    $region18: #{tpu_custom_call.1} parent=1 // pred_check
      _
    $region19: #{tpu_custom_call.1} parent=1 // pred_check_branch
      %369 = sbr.rel (0) target = $region21
    $region20: #{tpu_custom_call.1} parent=1 // pred_region
      %s371 = ssub.s32 128, 128
      %372 = vsyncadd [#allocation3], %s371
      %s374 = sshll.u32 [#allocation2], 4
      %s375 = int_to_ptr.vmem [resolvable:$true] %s374
      %377 = dma.vmem_to_hbm [thread:$0]  %s375, 128, %s4, [#allocation3]
    $region21: #{tpu_custom_call.1} parent=1 // pred_fallthru
      _
    // Predicated region
    $region22: #{tpu_custom_call.1} parent=1 // pred_check
      _
    $region23: #{tpu_custom_call.1} parent=1 // pred_check_branch
      %379 = sbr.rel (0) target = $region25
    $region24: #{tpu_custom_call.1} parent=1 // pred_region
      %380 = dma.done [#allocation3], 128
    $region25: #{tpu_custom_call.1} parent=1 // pred_fallthru
      _
    %381 = vsyncpa [#allocation3], 1

</llo_original>
